<compile_context>
chip_gen: v5e
topology: v5e:2x2
jax: 0.10.0
libtpu: 0.0.40
codegen_flags: <defaults>
</compile_context>

<pallas_src>
import jax
import jax.numpy as jnp
from jax.experimental import pallas as pl
from jax.experimental.pallas import tpu as pltpu


def _round_up(x, m):
    return ((x + m - 1) // m) * m


def _pad_to(a, shape):
    pads = [(0, t - s) for s, t in zip(a.shape, shape)]
    if all(p == (0, 0) for p in pads):
        return a
    return jnp.pad(a, pads)


def _largest_tile(dim, unit, cap):
    """Largest multiple of `unit` that divides `dim` and is <= cap.

    `dim` must itself be a multiple of `unit`; falls back to `unit`.
    """
    cap = max(unit, min(cap, dim))
    cap -= cap % unit
    for t in range(cap, 0, -unit):
        if dim % t == 0:
            return t
    return unit


def _tpu_vmem_capacity_bytes():
    """Physical VMEM of the current chip; conservative fallback off-TPU."""
    try:
        return int(pltpu.get_tpu_info().vmem_capacity_bytes)
    except Exception:
        return 128 * 1024 * 1024  # v5e/v6e-class default (hint only)


def _matmul_kernel_inplace(x_ref, w_ref, o_ref):
    """f32 output: accumulate straight into the resident output tile."""
    k = pl.program_id(2)

    @pl.when(k == 0)
    def _():
        o_ref[...] = jnp.zeros_like(o_ref)

    o_ref[...] += jnp.dot(
        x_ref[...], w_ref[...], preferred_element_type=jnp.float32
    )


def _matmul_kernel_acc(x_ref, w_ref, o_ref, acc_ref):
    """Narrow output dtypes: f32 VMEM accumulator, cast on the last k step."""
    k = pl.program_id(2)

    @pl.when(k == 0)
    def _():
        acc_ref[...] = jnp.zeros_like(acc_ref)

    acc_ref[...] += jnp.dot(
        x_ref[...], w_ref[...], preferred_element_type=jnp.float32
    )

    @pl.when(k == pl.num_programs(2) - 1)
    def _():
        o_ref[...] = acc_ref[...].astype(o_ref.dtype)


def bayes_linear_matmul(x, w_t, *, out_features=None, tm=512, tn=512, tk=512,
                        compute_dtype=None):
    """y = x @ w_t  (w_t is the weight pre-transposed to the (K, N) layout).

    x:            (B, K)
    w_t:          (Kp, Np) -- may already be zero-padded to multiples of 128.
    out_features: true OUT dim (output is sliced to it); default w_t.shape[1].
    compute_dtype: e.g. jnp.bfloat16 for 2x+ MXU throughput / half the DMA
                  bytes (essential on v5e); accumulation stays f32.
    """
    B, K = x.shape
    Kw, Nw = w_t.shape
    assert K <= Kw, "input feature dim must fit the weight's K dim"
    N = Nw if out_features is None else out_features
    assert N <= Nw
    out_dtype = x.dtype

    if compute_dtype is not None:
        x = x.astype(compute_dtype)
        w_t = w_t.astype(compute_dtype)
    elif w_t.dtype != x.dtype:
        w_t = w_t.astype(x.dtype)

    # Lane-align the weight only if the caller did not pre-pad (BayesLinear
    # pre-pads once in __init__ so this is a no-op on the hot path).
    Kp, Np = _round_up(Kw, 128), _round_up(Nw, 128)
    if (Kp, Np) != (Kw, Nw):
        w_t = _pad_to(w_t, (Kp, Np))
    Bp = _round_up(B, 8)
    xp = _pad_to(x, (Bp, Kp))  # zero K-padding => padded weight rows are inert

    # Divisor-aware tiles: padding never exceeds the (8, 128) minimum, and the
    # big 512-class tiles keep the pipeline near the HBM roofline.
    tm = _largest_tile(Bp, 8, tm)
    tn = _largest_tile(Np, 128, tn)
    tk = _largest_tile(Kp, 128, tk)

    vmem_cap = _tpu_vmem_capacity_bytes()
    # v7x (64 MiB VMEM / 2 TensorCores): if both parallel axes collapse to a
    # single tile, split one so the second core is not idle.
    if vmem_cap <= 64 * 1024 * 1024 and (Bp // tm) * (Np // tn) < 2:
        if Bp >= 16:
            tm = _largest_tile(Bp, 8, max(8, tm // 2))
        elif Np >= 256:
            tn = _largest_tile(Np, 128, max(128, tn // 2))

    grid = (Bp // tm, Np // tn, Kp // tk)

    cost = pl.CostEstimate(
        flops=2 * B * K * N,
        transcendentals=0,  # noise is generated outside the kernel
        bytes_accessed=int(x.dtype.itemsize) * (B * K + K * N)
        + int(out_dtype.itemsize) * B * N,
    )
    compiler_params = pltpu.CompilerParams(
        dimension_semantics=("parallel", "parallel", "arbitrary"),
        # ~3/4 of physical VMEM: ~96 MiB on v5e/v6e, ~48 MiB on v7x.
        vmem_limit_bytes=max(32 * 1024 * 1024,
                             min((vmem_cap * 3) // 4, 100 * 1024 * 1024)),
    )
    out_shape = jax.ShapeDtypeStruct((Bp, Np), out_dtype)

    in_specs = [
        pl.BlockSpec((tm, tk), lambda i, j, k: (i, k)),
        # TODO(synk): in the tiny-batch, weight-DMA-bound regime on v6e,
        # pipeline_mode=pl.Buffered(3) on this spec can hide the K*N stream.
        pl.BlockSpec((tk, tn), lambda i, j, k: (k, j)),
    ]
    out_spec = pl.BlockSpec((tm, tn), lambda i, j, k: (i, j))

    if out_dtype == jnp.float32:
        kernel = _matmul_kernel_inplace
        scratch = []
    else:
        kernel = _matmul_kernel_acc
        scratch = [pltpu.VMEM((tm, tn), jnp.float32)]

    grid_spec = pltpu.PrefetchScalarGridSpec(
        num_scalar_prefetch=0,
        grid=grid,
        in_specs=in_specs,
        out_specs=out_spec,
        scratch_shapes=scratch,
    )
    out = pl.pallas_call(
        kernel,
        out_shape=out_shape,
        grid_spec=grid_spec,
        compiler_params=compiler_params,
        cost_estimate=cost,
    )(xp, w_t)

    if (Bp, Np) != (B, N):
        out = out[:B, :N]
    return out


class BayesLinear:
    """JAX / Pallas port of the PyTorch BayesLinear module (forward path only)."""

    def __init__(self, input_size, output_size):
        self.inp = input_size
        self.out = output_size
        # torch-style (out, in) parameters, deterministic init as in __init__:
        self.w_mu = 1e-06 + jnp.zeros((output_size, input_size), dtype=jnp.float32)
        self.w_var = 0.1 * jnp.ones((output_size, input_size), dtype=jnp.float32)
        self.w_prior_mu = jnp.array([0.0], dtype=jnp.float32)
        self.w_prior_var = jnp.array([1.0], dtype=jnp.float32)
        self.training = False  # eval mode by default
        # Pre-transpose + zero-pad ONCE to the lane-aligned (K, N) MXU feed
        # layout -- forward() never pays a per-call HBM pad / transpose.
        self._kp = _round_up(input_size, 128)
        self._np = _round_up(output_size, 128)
        self._w_t_padded = _pad_to(self.w_mu.T, (self._kp, self._np))

    def refresh_weight(self):
        """Re-derive the padded transposed weight after mutating w_mu."""
        self._w_t_padded = _pad_to(self.w_mu.T, (self._kp, self._np))

    def forward(self, x, sampling=False, key=None, compute_dtype=None):
        w_t = self._w_t_padded
        if self.training or sampling:
            # torch.distributions.Normal(w_mu, 1).sample() == w_mu + N(0, 1).
            # (w_var is intentionally unused -- std fixed at 1 -- matching the
            #  quirky PyTorch reference.)
            # The draw depends only on the weight, so it is generated ONCE per
            # forward -- hoisted fully out of the batch-tile loop -- instead of
            # re-sampled per tile inside the kernel.  Noise in padded-K rows
            # meets zero x columns; noise in padded-N columns is sliced off the
            # output, so semantics are unchanged.
            assert key is not None, "need a PRNG key when sampling"
            noise = jax.random.normal(key, w_t.shape, dtype=w_t.dtype)
            w_t = w_t + noise
        return bayes_linear_matmul(x, w_t, out_features=self.out,
                                   compute_dtype=compute_dtype)

    # TODO(synk): loss_layer()/kl() are training-time reductions outside
    # forward(); not ported to Pallas.


if __name__ == "__main__":
    root = jax.random.PRNGKey(0)
    k_x, k_s, k_big_x, k_big_w, k_perm, k_s2 = jax.random.split(root, 6)

    # ---- Small shapes consistent with the module demo ---------------------
    # (In production, matmuls this tiny should just call jnp.dot; the Pallas
    #  path is exercised here for validation.)
    batch, input_size, output_size = 8, 32, 16
    x = jax.random.normal(k_x, (batch, input_size), dtype=jnp.float32)
    layer = BayesLinear(input_size, output_size)

    # Eval path (w = w_mu):
    y_eval = layer.forward(x, sampling=False)
    jax.block_until_ready(y_eval)
    ref = x @ layer.w_mu.T
    assert y_eval.shape == (batch, output_size)
    assert jnp.allclose(y_eval, ref, atol=1e-5, rtol=1e-5)

    # Sampling path (w = w_mu + N(0, 1)), exact reference with the same draw:
    y_sample = layer.forward(x, sampling=True, key=k_s)
    jax.block_until_ready(y_sample)
    assert y_sample.shape == (batch, output_size)
    assert bool(jnp.all(jnp.isfinite(y_sample)))
    noise = jax.random.normal(k_s, (layer._kp, layer._np), dtype=jnp.float32)
    w_draw = layer.w_mu.T + noise[:input_size, :output_size]
    ref_s = x @ w_draw
    assert jnp.allclose(y_sample, ref_s, atol=1e-4, rtol=1e-4)
    # Same key -> identical (reproducible) draw:
    y_sample2 = layer.forward(x, sampling=True, key=k_s)
    jax.block_until_ready(y_sample2)
    assert jnp.allclose(y_sample, y_sample2)

    # ---- Multi-tile shapes: exercise the (i, j, k) grid / accumulation ----
    B2, IN2, OUT2 = 512, 1024, 384
    x2 = jax.random.normal(k_big_x, (B2, IN2), dtype=jnp.float32)
    w2 = jax.random.normal(k_big_w, (OUT2, IN2), dtype=jnp.float32)
    ref2 = x2 @ w2.T

    # f32 output -> in-place accumulation kernel (no scratch).
    y2 = bayes_linear_matmul(x2, w2.T)
    jax.block_until_ready(y2)
    assert jnp.allclose(y2, ref2, atol=1e-2, rtol=1e-2)

    # bf16 compute / f32 accumulation (recommended on v5e; fewer HBM bytes on
    # every generation).
    y2_bf16 = bayes_linear_matmul(x2, w2.T, compute_dtype=jnp.bfloat16)
    jax.block_until_ready(y2_bf16)
    assert jnp.allclose(y2_bf16, ref2, atol=2.0, rtol=5e-2)

    # bf16 in / bf16 out -> scratch-accumulator kernel variant.
    y2_b = bayes_linear_matmul(x2.astype(jnp.bfloat16), w2.T.astype(jnp.bfloat16))
    jax.block_until_ready(y2_b)
    assert y2_b.dtype == jnp.bfloat16
    assert jnp.allclose(y2_b.astype(jnp.float32), ref2, atol=2.0, rtol=5e-2)

    # Sampling at multi-tile shape: ONE weight draw is shared across the whole
    # batch, so permuting batch rows must permute the outputs identically.
    layer2 = BayesLinear(IN2, OUT2)
    perm = jax.random.permutation(k_perm, B2)
    ys_a = layer2.forward(x2, sampling=True, key=k_s2)
    ys_b = layer2.forward(x2[perm], sampling=True, key=k_s2)
    jax.block_until_ready((ys_a, ys_b))
    assert jnp.allclose(ys_a[perm], ys_b, atol=1e-3, rtol=1e-3)

    print("KERNEL_OK")
</pallas_src>

<mosaic_0001>
module attributes {stable_mosaic.version = 11 : i64} {
  func.func @_matmul_kernel_inplace(%arg0: i32, %arg1: i32, %arg2: i32, %arg3: memref<8x128xf32, #tpu.memory_space<vmem>>, %arg4: memref<128x128xf32, #tpu.memory_space<vmem>>, %arg5: memref<8x128xf32, #tpu.memory_space<vmem>>) attributes {dimension_semantics = [#tpu.dimension_semantics<parallel>, #tpu.dimension_semantics<parallel>, #tpu.dimension_semantics<arbitrary>], iteration_bounds = array<i64: 1, 1, 1>, scalar_prefetch = 0 : i64, scratch_operands = 0 : i64, tpu.core_type = #tpu.core_type<tc>, window_params = [{transform_indices = @transform_0, window_bounds = array<i64: 8, 128>}, {transform_indices = @transform_1, window_bounds = array<i64: 128, 128>}, {transform_indices = @transform_2, window_bounds = array<i64: 8, 128>}]} {
    %c0_i32 = arith.constant 0 : i32
    %0 = arith.cmpi eq, %arg2, %c0_i32 : i32
    %1 = arith.extui %0 : i1 to i32
    %c0_i32_0 = arith.constant 0 : i32
    %2 = arith.cmpi ne, %1, %c0_i32_0 : i32
    scf.if %2 {
      %cst_8 = arith.constant 0.000000e+00 : f32
      %9 = vector.broadcast %cst_8 : f32 to vector<8x128xf32>
      %c0_9 = arith.constant 0 : index
      %c0_10 = arith.constant 0 : index
      %10 = vector.load %arg5[%c0_9, %c0_10] : memref<8x128xf32, #tpu.memory_space<vmem>>, vector<8x128xf32>
      tpu.vector_store %arg5[%c0_9, %c0_10], %9 {strides = array<i32>} : memref<8x128xf32, #tpu.memory_space<vmem>>, vector<8x128xf32>,
    } else {
    }
    %c0 = arith.constant 0 : index
    %c0_1 = arith.constant 0 : index
    %3 = vector.load %arg5[%c0, %c0_1] : memref<8x128xf32, #tpu.memory_space<vmem>>, vector<8x128xf32>
    %c0_2 = arith.constant 0 : index
    %c0_3 = arith.constant 0 : index
    %4 = vector.load %arg3[%c0_2, %c0_3] : memref<8x128xf32, #tpu.memory_space<vmem>>, vector<8x128xf32>
    %c0_4 = arith.constant 0 : index
    %c0_5 = arith.constant 0 : index
    %5 = vector.load %arg4[%c0_4, %c0_5] : memref<128x128xf32, #tpu.memory_space<vmem>>, vector<128x128xf32>
    %cst = arith.constant dense<0.000000e+00> : vector<8x128xf32>
    %6 = tpu.matmul %4, %5, %cst {dimension_numbers = #tpu.dot_dimension_numbers<[1], [0], [0], [1], [0, 0, 1, 1], [], []>} : vector<8x128xf32>, vector<128x128xf32>, vector<8x128xf32> -> vector<8x128xf32>
    %7 = arith.addf %3, %6 : vector<8x128xf32>
    %c0_6 = arith.constant 0 : index
    %c0_7 = arith.constant 0 : index
    %8 = vector.load %arg5[%c0_6, %c0_7] : memref<8x128xf32, #tpu.memory_space<vmem>>, vector<8x128xf32>
    tpu.vector_store %arg5[%c0_6, %c0_7], %7 {strides = array<i32>} : memref<8x128xf32, #tpu.memory_space<vmem>>, vector<8x128xf32>,
    return
  }
  func.func @transform_0(%arg0: i32, %arg1: i32, %arg2: i32) -> (i32, i32) {
    %c0_i32 = arith.constant 0 : i32
    return %arg0, %arg2 : i32, i32
  }
  func.func @transform_1(%arg0: i32, %arg1: i32, %arg2: i32) -> (i32, i32) {
    %c0_i32 = arith.constant 0 : i32
    return %arg2, %arg1 : i32, i32
  }
  func.func @transform_2(%arg0: i32, %arg1: i32, %arg2: i32) -> (i32, i32) {
    %c0_i32 = arith.constant 0 : i32
    return %arg0, %arg1 : i32, i32
  }
}

</mosaic_0001>

<llo_original>
// kernel: tpu_custom_call.1
$region0: #{tpu_custom_call.1}
  #allocation0 [shape = 'u32[]', space=smem, size = 0x4, offset = 0x4, fixed_abs, tag = 'smem constant byte address 0x4 - core index']
  #allocation1 [shape = 'u32[72,128]{1,0:T(1,128)}', space=vmem, size = 0x9000, scoped, tag = 'internal scratch']
  %s0 = inlined_call_operand.hbm [shape: f32[8,128], index: 0, kind: input, shape index: {}]
  %s1 = inlined_call_operand.hbm [shape: f32[128,128], index: 1, kind: input, shape index: {}]
  %s2 = inlined_call_operand.hbm [shape: f32[8,128], index: 2, kind: output, shape index: {}]
  %s3 = sld [smem:[#allocation0]]
  $region30: #{tpu_custom_call.1} parent=0
    _
  %s5 = ssub.s32 1, %s3
  %s6 = scalar_select 0, %s5, %s3
  $region1: #{tpu_custom_call.1} parent=0
    #allocation2 [shape = 'u8[4096]{0}', space=vmem, size = 0x1000, scoped, tag = 'input window, operand 0, single buffered']
    #allocation3 [shape = 's32[1]{0}', space=sflag, size = 0x4, scoped, tag = 'scoped memory for tpu_custom_call.1']
    #allocation4 [shape = 's32[1]{0}', space=sflag, size = 0x4, scoped, tag = 'scoped memory for tpu_custom_call.1']
    #allocation5 [shape = 'u8[65536]{0}', space=vmem, size = 0x10000, scoped, tag = 'input window, operand 1, single buffered']
    #allocation6 [shape = 's32[1]{0}', space=sflag, size = 0x4, scoped, tag = 'scoped memory for tpu_custom_call.1']
    #allocation7 [shape = 'u8[4096]{0}', space=vmem, size = 0x1000, scoped, tag = 'output window, operand 0, single buffered']
    %7 = vsyncpa [#allocation3], 0
    %8 = vsyncpa [#allocation6], 0
    %9 = vsyncpa [#allocation4], 0
    // Predicated region
    $region2: #{tpu_custom_call.1} parent=1 // pred_check
      _
    $region3: #{tpu_custom_call.1} parent=1 // pred_check_branch
      %11 = sbr.rel (0) target = $region5
    $region4: #{tpu_custom_call.1} parent=1 // pred_region
      %13 = vsyncadd [#allocation3], 0
      %s15 = sshll.u32 %s0, 4
      %s16 = int_to_ptr.hbm [resolvable:$true] %s15
      %s17 = sshll.u32 [#allocation2], 4
      %s18 = int_to_ptr.vmem [resolvable:$true] %s17
      %20 = dma.hbm_to_vmem [thread:$0]  %s16, 128, %s18, [#allocation3]
    $region5: #{tpu_custom_call.1} parent=1 // pred_fallthru
      _
    // Predicated region
    $region6: #{tpu_custom_call.1} parent=1 // pred_check
      _
    $region7: #{tpu_custom_call.1} parent=1 // pred_check_branch
      %22 = sbr.rel (0) target = $region9
    $region8: #{tpu_custom_call.1} parent=1 // pred_region
      %24 = vsyncadd [#allocation6], 0
      %s25 = sshll.u32 %s1, 4
      %s26 = int_to_ptr.hbm [resolvable:$true] %s25
      %s27 = sshll.u32 [#allocation5], 4
      %s28 = int_to_ptr.vmem [resolvable:$true] %s27
      %33 = dma.hbm_to_vmem [thread:$0]  %s26, 2048, %s28, [#allocation6], 128, 128, 8
    $region9: #{tpu_custom_call.1} parent=1 // pred_fallthru
      _
    // Predicated region
    $region10: #{tpu_custom_call.1} parent=1 // pred_check
      _
    $region11: #{tpu_custom_call.1} parent=1 // pred_check_branch
      %35 = sbr.rel (0) target = $region13
    $region12: #{tpu_custom_call.1} parent=1 // pred_region
      %37 = dma.done [#allocation3], 128
    $region13: #{tpu_custom_call.1} parent=1 // pred_fallthru
      _
    // Predicated region
    $region14: #{tpu_custom_call.1} parent=1 // pred_check
      _
    $region15: #{tpu_custom_call.1} parent=1 // pred_check_branch
      %39 = sbr.rel (0) target = $region17
    $region16: #{tpu_custom_call.1} parent=1 // pred_region
      %41 = dma.done [#allocation6], 2048
    $region17: #{tpu_custom_call.1} parent=1 // pred_fallthru
      _
    %p42 = scmp.eq.s32.totalorder 0, 0
    // Predicated region
    $region18: #{tpu_custom_call.1} parent=1 // pred_check
      %p43 = pneg %p42
    $region19: #{tpu_custom_call.1} parent=1 // pred_check_branch
      %45 = sbr.rel (%p43) target = $region21
    $region20: #{tpu_custom_call.1} parent=1 // pred_region
      %46 = vst [vmem:[#allocation7] sm:$0xff] 0.0
    $region21: #{tpu_custom_call.1} parent=1 // pred_fallthru
      _
    %v47 = vld [vmem:[#allocation7] sm:$0xff]
    %v48 = vld [vmem:[#allocation2] sm:$0xff]
    %v49 = vld [vmem:[#allocation5] sm:$0xff]
    %v50 = vld [vmem:[#allocation5 + $0x8] sm:$0xff]
    %v51 = vld [vmem:[#allocation5 + $0x10] sm:$0xff]
    %v52 = vld [vmem:[#allocation5 + $0x18] sm:$0xff]
    %v53 = vld [vmem:[#allocation5 + $0x20] sm:$0xff]
    %v54 = vld [vmem:[#allocation5 + $0x28] sm:$0xff]
    %v55 = vld [vmem:[#allocation5 + $0x30] sm:$0xff]
    %v56 = vld [vmem:[#allocation5 + $0x38] sm:$0xff]
    %v57 = vld [vmem:[#allocation5 + $0x40] sm:$0xff]
    %v58 = vld [vmem:[#allocation5 + $0x48] sm:$0xff]
    %v59 = vld [vmem:[#allocation5 + $0x50] sm:$0xff]
    %v60 = vld [vmem:[#allocation5 + $0x58] sm:$0xff]
    %v61 = vld [vmem:[#allocation5 + $0x60] sm:$0xff]
    %v62 = vld [vmem:[#allocation5 + $0x68] sm:$0xff]
    %v63 = vld [vmem:[#allocation5 + $0x70] sm:$0xff]
    %v64 = vld [vmem:[#allocation5 + $0x78] sm:$0xff]
    %65 = vmatpush.msra.mxu0 %v64
    %66 = vmatpush.msra.mxu0 %v63
    %67 = vmatpush.msra.mxu0 %v62
    %68 = vmatpush.msra.mxu0 %v61
    %69 = vmatpush.msra.mxu0 %v60
    %70 = vmatpush.msra.mxu0 %v59
    %71 = vmatpush.msra.mxu0 %v58
    %72 = vmatpush.msra.mxu0 %v57
    %73 = vmatpush.msra.mxu0 %v56
    %74 = vmatpush.msra.mxu0 %v55
    %75 = vmatpush.msra.mxu0 %v54
    %76 = vmatpush.msra.mxu0 %v53
    %77 = vmatpush.msra.mxu0 %v52
    %78 = vmatpush.msra.mxu0 %v51
    %79 = vmatpush.msra.mxu0 %v50
    %80 = vmatpush.msra.mxu0 %v49
    %81 = vmatmul.f32.gmra.mxu0 %v48
    %v82 = vpop.f32.mrf.mxu0
    %v83 = vadd.f32 0.0, %v82
    %84 = vdwg.mxu0
    %v85 = vadd.f32 %v47, %v83
    %86 = vst [vmem:[#allocation7] sm:$0xff] %v85
    // Predicated region
    $region22: #{tpu_custom_call.1} parent=1 // pred_check
      _
    $region23: #{tpu_custom_call.1} parent=1 // pred_check_branch
      %88 = sbr.rel (0) target = $region25
    $region24: #{tpu_custom_call.1} parent=1 // pred_region
      %90 = vsyncadd [#allocation4], 0
      %s92 = sshll.u32 [#allocation7], 4
      %s93 = int_to_ptr.vmem [resolvable:$true] %s92
      %s94 = sshll.u32 %s2, 4
      %s95 = int_to_ptr.hbm [resolvable:$true] %s94
      %97 = dma.vmem_to_hbm [thread:$0]  %s93, 128, %s95, [#allocation4]
    $region25: #{tpu_custom_call.1} parent=1 // pred_fallthru
      _
    // Predicated region
    $region26: #{tpu_custom_call.1} parent=1 // pred_check
      _
    $region27: #{tpu_custom_call.1} parent=1 // pred_check_branch
      %99 = sbr.rel (0) target = $region29
    $region28: #{tpu_custom_call.1} parent=1 // pred_region
      %101 = dma.done [#allocation4], 128
    $region29: #{tpu_custom_call.1} parent=1 // pred_fallthru
      _
    %102 = vsyncpa [#allocation3], 1
    %103 = vsyncpa [#allocation6], 1
    %104 = vsyncpa [#allocation4], 1

</llo_original>
